<compile_context>
chip_gen: v6e
topology: v6e:2x2x1
jax: 0.10.0
libtpu: 0.0.40
codegen_flags: <defaults>
</compile_context>

<pallas_src>
import functools

import jax
import jax.numpy as jnp
from jax.experimental import pallas as pl
from jax.experimental.pallas import tpu as pltpu

_LANES = 128


@functools.lru_cache(maxsize=None)
def _roll_matches_jnp():
    """Probe pltpu.roll's rotation direction once with a tiny one-off kernel."""
    def probe(x_ref, o_ref):
        o_ref[...] = pltpu.roll(x_ref[...], 1, axis=1)

    x = jnp.broadcast_to(jnp.arange(_LANES, dtype=jnp.float32), (8, _LANES))
    y = pl.pallas_call(
        probe, out_shape=jax.ShapeDtypeStruct((8, _LANES), jnp.float32)
    )(x)
    # jnp.roll(row, +1) brings the last lane to lane 0.
    return bool(y[0, 0] == float(_LANES - 1))


def _nm_prune_kernel(w_ref, o_ref, *, n, m, roll_like_jnp):
    """w_ref/o_ref: (row_tile, 128) tile; each M consecutive lanes = one group."""
    x = w_ref[...]
    a = jnp.abs(x)
    L = x.shape[-1]
    lane = jax.lax.broadcasted_iota(jnp.int32, x.shape, x.ndim - 1)
    member = (lane & (m - 1)) if (m & (m - 1)) == 0 else (lane % m)

    # rank_i = #{ j != i in group : |w_j| > |w_i|  or  (|w_j| == |w_i| and j < i) }
    # For d = 1..m-1, the group-mate with member index (i+d) mod m sits at lane
    # offset +d when i < m-d (higher index -> strict >), and at lane offset
    # -(m-d) when i >= m-d (lower index -> ties count, >=).  Both offsets are
    # fetched with lane rotations (XLU); row-wrap lanes of each rotation are
    # always excluded by the member-index select.
    rank = jnp.zeros(x.shape, jnp.int32)
    for d in range(1, m):
        if roll_like_jnp:
            sh_hi, sh_lo = L - d, m - d
        else:
            sh_hi, sh_lo = d, L - (m - d)
        hi = pltpu.roll(a, sh_hi, axis=x.ndim - 1)   # |w| at lane offset +d
        lo = pltpu.roll(a, sh_lo, axis=x.ndim - 1)   # |w| at lane offset -(m-d)
        beats = jnp.where(member < (m - d), hi > a, lo >= a)
        rank = rank + beats.astype(jnp.int32)

    o_ref[...] = jnp.where(rank < n, x, jnp.zeros_like(x))


def lsq_weight_prune(weight, n=4, m=8, *, row_tile=1024):
    """Apply N:M magnitude pruning to `weight` (any shape, numel % m == 0)."""
    orig_shape = weight.shape
    total = weight.size
    if total % m != 0:
        raise ValueError("weight//M !!")
    if m < 1 or _LANES % m != 0:
        raise NotImplementedError("group size m must divide 128")

    flat = weight.reshape(-1)                     # free contiguous view, no transpose
    padded = pl.cdiv(total, _LANES) * _LANES
    if padded != total:
        # Rare path: pad with whole all-zero groups (pad amount is a multiple
        # of m because total % m == 0 and 128 % m == 0); pruning zeros is a no-op.
        flat = jnp.pad(flat, (0, padded - total))
    rows = padded // _LANES
    x2 = flat.reshape(rows, _LANES)               # free reshape

    rt = min(int(row_tile), rows)
    if rt < rows and rt % 8 != 0:                 # sublane alignment for interior tiles
        rt = max(8, (rt // 8) * 8)
    grid = pl.cdiv(rows, rt)                      # partial last block is masked by Pallas

    itemsize = jnp.dtype(weight.dtype).itemsize
    cost = pl.CostEstimate(
        flops=6 * m * padded,
        transcendentals=0,
        bytes_accessed=2 * padded * itemsize,
    )

    out = pl.pallas_call(
        functools.partial(
            _nm_prune_kernel, n=n, m=m, roll_like_jnp=_roll_matches_jnp()
        ),
        out_shape=jax.ShapeDtypeStruct((rows, _LANES), weight.dtype),
        grid=(grid,),
        in_specs=[pl.BlockSpec((rt, _LANES), lambda i: (i, 0))],
        out_specs=pl.BlockSpec((rt, _LANES), lambda i: (i, 0)),
        compiler_params=pltpu.CompilerParams(
            dimension_semantics=("parallel",)
        ),
        cost_estimate=cost,
    )(x2)

    out_flat = out.reshape(-1)
    if padded != total:
        out_flat = out_flat[:total]
    return out_flat.reshape(orig_shape)


def _ref_prune(weight, n, m):
    """Pure-JAX reference replicating torch topk/scatter semantics."""
    g = weight.reshape(-1, m)
    a = jnp.abs(g)
    # argsort is stable -> among ties the lower index comes first (matches the
    # kernel's tie-break rule).
    idx = jnp.argsort(-a, axis=1)[:, :n]
    rows = jnp.arange(g.shape[0])[:, None]
    mask = jnp.zeros_like(g).at[rows, idx].set(1.0)
    return (g * mask).reshape(weight.shape)


if __name__ == "__main__":
    key = jax.random.PRNGKey(0)
    k1, k2, k3, k4 = jax.random.split(key, 4)

    cases = [
        # Linear-style weight (hidden=32): 1024 elems -> 8 rows of 128 lanes.
        (jax.random.normal(k1, (32, 32), dtype=jnp.float32), {}),
        # Conv-style weight (out=8, in=4, kH=4, kW=4): 512 elems -> 4 rows.
        (jax.random.normal(k2, (8, 4, 4, 4), dtype=jnp.float32), {}),
        # Exercises the multi-step grid with a partial last block (rows=40, tile=16).
        (jax.random.normal(k3, (40, 128), dtype=jnp.float32), {"row_tile": 16}),
        # Exercises the tail-pad path (numel=40, not a multiple of 128).
        (jax.random.normal(k4, (5, 8), dtype=jnp.float32), {}),
    ]

    ok = True
    for w, kw in cases:
        pruned = lsq_weight_prune(w, n=4, m=8, **kw)
        jax.block_until_ready(pruned)
        expected = _ref_prune(w, 4, 8)
        ok &= bool(jnp.allclose(pruned, expected, atol=0.0, rtol=0.0))
        # at most 4 nonzeros allowed per group of 8 (groups with natural zeros
        # may have fewer nonzeros, never more)
        nz_per_group = jnp.sum(pruned.reshape(-1, 8) != 0.0, axis=1)
        ok &= bool(jnp.all(nz_per_group <= 4))

    # TODO(synk): self.quantizer is None in the reference default; no LSQ
    # quantizer forward is composed here.
    if ok:
        print("KERNEL_OK")
    else:
        raise SystemExit("mismatch vs reference")
</pallas_src>

<mosaic_0001>
module attributes {stable_mosaic.version = 11 : i64} {
  func.func @probe(%arg0: memref<8x128xf32, #tpu.memory_space<vmem>>, %arg1: memref<8x128xf32, #tpu.memory_space<vmem>>) attributes {dimension_semantics = [], scalar_prefetch = 0 : i64, scratch_operands = 0 : i64, tpu.core_type = #tpu.core_type<tc>} {
    %c0 = arith.constant 0 : index
    %c0_0 = arith.constant 0 : index
    %0 = vector.load %arg0[%c0, %c0_0] : memref<8x128xf32, #tpu.memory_space<vmem>>, vector<8x128xf32>
    %c1_i32 = arith.constant 1 : i32
    %1 = tpu.dynamic_rotate %0 by %c1_i32 dim 1 : vector<8x128xf32>, i32 -> vector<8x128xf32>
    %c0_1 = arith.constant 0 : index
    %c0_2 = arith.constant 0 : index
    %2 = vector.load %arg1[%c0_1, %c0_2] : memref<8x128xf32, #tpu.memory_space<vmem>>, vector<8x128xf32>
    tpu.vector_store %arg1[%c0_1, %c0_2], %1 {strides = array<i32>} : memref<8x128xf32, #tpu.memory_space<vmem>>, vector<8x128xf32>,
    return
  }
}

</mosaic_0001>

<llo_original>
// kernel: tpu_custom_call.1
$region0: #{tpu_custom_call.1}
  #allocation0 [shape = 'u32[]', space=smem, size = 0x4, offset = 0x4, fixed_abs, tag = 'smem constant byte address 0x4 - core index']
  #allocation1 [shape = 'u32[144,128]{1,0:T(1,128)}', space=vmem, size = 0x12000, scoped, tag = 'internal scratch']
  %s0 = inlined_call_operand.hbm [shape: f32[8,128], index: 0, kind: input, shape index: {}]
  %s1 = inlined_call_operand.hbm [shape: f32[8,128], index: 1, kind: output, shape index: {}]
  %s2 = sld [smem:[#allocation0]]
  $region18: #{tpu_custom_call.1} parent=0
    _
  %s4 = ssub.s32 1, %s2
  %s5 = scalar_select 0, %s4, %s2
  $region1: #{tpu_custom_call.1} parent=0
    #allocation2 [shape = 'u8[4096]{0}', space=vmem, size = 0x1000, scoped, tag = 'input window, operand 0, single buffered']
    #allocation3 [shape = 's32[1]{0}', space=sflag, size = 0x4, scoped, tag = 'scoped memory for tpu_custom_call.1']
    #allocation4 [shape = 's32[1]{0}', space=sflag, size = 0x4, scoped, tag = 'scoped memory for tpu_custom_call.1']
    #allocation5 [shape = 'u8[4096]{0}', space=vmem, size = 0x1000, scoped, tag = 'output window, operand 0, single buffered']
    %6 = vsyncpa [#allocation3], 0
    %7 = vsyncpa [#allocation4], 0
    // Predicated region
    $region2: #{tpu_custom_call.1} parent=1 // pred_check
      _
    $region3: #{tpu_custom_call.1} parent=1 // pred_check_branch
      %9 = sbr.rel (0) target = $region5
    $region4: #{tpu_custom_call.1} parent=1 // pred_region
      %s11 = ssub.s32 128, 128
      %12 = vsyncadd [#allocation3], %s11
      %s14 = sshll.u32 [#allocation2], 4
      %s15 = int_to_ptr.vmem [resolvable:$true] %s14
      %17 = dma.hbm_to_vmem [thread:$0]  %s0, 128, %s15, [#allocation3]
    $region5: #{tpu_custom_call.1} parent=1 // pred_fallthru
      _
    // Predicated region
    $region6: #{tpu_custom_call.1} parent=1 // pred_check
      _
    $region7: #{tpu_custom_call.1} parent=1 // pred_check_branch
      %19 = sbr.rel (0) target = $region9
    $region8: #{tpu_custom_call.1} parent=1 // pred_region
      %20 = dma.done [#allocation3], 128
    $region9: #{tpu_custom_call.1} parent=1 // pred_fallthru
      _
    %v21 = vld [vmem:[#allocation2] sm:$0xff]
    %22 = vrot.lane.b32.xlu0 %v21, 1
    %v23 = vpop.permute.xlu0 %22
    %24 = vst [vmem:[#allocation5] sm:$0xff] %v23
    // Predicated region
    $region10: #{tpu_custom_call.1} parent=1 // pred_check
      _
    $region11: #{tpu_custom_call.1} parent=1 // pred_check_branch
      %26 = sbr.rel (0) target = $region13
    $region12: #{tpu_custom_call.1} parent=1 // pred_region
      %s28 = ssub.s32 128, 128
      %29 = vsyncadd [#allocation4], %s28
      %s31 = sshll.u32 [#allocation5], 4
      %s32 = int_to_ptr.vmem [resolvable:$true] %s31
      %34 = dma.vmem_to_hbm [thread:$0]  %s32, 128, %s1, [#allocation4]
    $region13: #{tpu_custom_call.1} parent=1 // pred_fallthru
      _
    // Predicated region
    $region14: #{tpu_custom_call.1} parent=1 // pred_check
      _
    $region15: #{tpu_custom_call.1} parent=1 // pred_check_branch
      %36 = sbr.rel (0) target = $region17
    $region16: #{tpu_custom_call.1} parent=1 // pred_region
      %37 = dma.done [#allocation4], 128
    $region17: #{tpu_custom_call.1} parent=1 // pred_fallthru
      _
    %38 = vsyncpa [#allocation3], 1
    %39 = vsyncpa [#allocation4], 1

</llo_original>
